<compile_context>
chip_gen: v7x
topology: tpu7x:2x2x1
jax: 0.10.0
libtpu: 0.0.40
codegen_flags: <defaults>
</compile_context>

<pallas_src>
import functools

import jax
import jax.numpy as jnp
from jax.experimental import pallas as pl
from jax.experimental.pallas import tpu as pltpu


# ------------------------------ small helpers ------------------------------
def _round_up(x, m):
    return (x + m - 1) // m * m


def _vmem_capacity_bytes():
    try:
        return int(pltpu.get_tpu_info().vmem_capacity_bytes)
    except Exception:
        return 64 * 1024 * 1024          # conservative fallback (v7x per-TC VMEM)


def _kernel_b_bytes(chunk, bblk, hp):
    """Approximate VMEM footprint of one recurrence grid step."""
    g4 = 4 * hp
    xp = 2 * chunk * bblk * g4 * 2       # bf16 x_proj block, double buffered
    out = 2 * chunk * bblk * hp * 4      # f32 hidden output block, double buffered
    whh = hp * g4 * 2                    # resident bf16 W_hh (single buffer)
    bias = g4 * 4                        # resident f32 bias
    cn = 2 * bblk * hp * 4               # final cell output
    scratch = 2 * bblk * hp * 4          # h + c state scratch
    return xp + out + whh + bias + cn + scratch


def _choose_time_chunk(seq_len, bblk, hp, budget):
    """Timesteps per recurrence grid step (the sequence is padded up to it)."""
    for c in (32, 24, 16, 8, 4, 2, 1):
        if _kernel_b_bytes(c, bblk, hp) > budget:
            continue
        s_pad = _round_up(seq_len, c)
        if (s_pad - seq_len) * 10 <= seq_len:      # keep time padding <= ~10%
            return c
    return 1


def _choose_batch_block(bp):
    """Batch rows per recurrence block (multiple of 8, divides bp).
    Produces >= 2 blocks when bp >= 16 so the parallel batch axis can be split
    across v7x's two TensorCores."""
    if bp <= 8:
        return bp
    best = 8
    c = 8
    while c <= bp // 2:
        if bp % c == 0:
            best = c
        c += 8
    return best


def _kernel_a_bytes(rows, e, g4):
    return 2 * rows * e * 2 + 2 * rows * g4 * 2 + e * g4 * 2


def _choose_a_rows(n_chunks, chunk_rows, e, g4, budget):
    """Rows per block in the projection kernel: g * chunk_rows with g | n_chunks."""
    best = chunk_rows
    for g in range(1, n_chunks + 1):
        rows = g * chunk_rows
        if _kernel_a_bytes(rows, e, g4) > budget:
            break
        if n_chunks % g == 0:
            best = rows
    return best


def _pad_gate_rows(w, h, hp):
    """(4H, K) -> (4Hp, K): zero-pad each gate's output rows to Hp (exact)."""
    k = w.shape[1]
    w4 = w.reshape(4, h, k)
    w4 = jnp.pad(w4, ((0, 0), (0, hp - h), (0, 0)))
    return w4.reshape(4 * hp, k)


def _pad_gate_vec(v, h, hp):
    v4 = v.reshape(4, h)
    v4 = jnp.pad(v4, ((0, 0), (0, hp - h)))
    return v4.reshape(4 * hp)


def _resident_spec(block_shape, use_buffered):
    """Constant-index resident block; single-buffered when supported."""
    idx_map = lambda *_: (0,) * len(block_shape)
    if use_buffered:
        return pl.BlockSpec(block_shape, idx_map, pipeline_mode=pl.Buffered(1))
    return pl.BlockSpec(block_shape, idx_map)


# -------------------- Kernel A: ReLU + input projection --------------------
def _proj_kernel(x_ref, w_ref, out_ref):
    # x_ref: (R, E) bf16 pre-ReLU embeddings (time-major flattened rows)
    # w_ref: (E, 4Hp) bf16, resident single buffer
    x = jnp.maximum(x_ref[...], 0)                              # ReLU (commutes with bf16 cast)
    out_ref[...] = jnp.dot(
        x, w_ref[...], preferred_element_type=jnp.float32       # MXU, f32 accumulation
    ).astype(jnp.bfloat16)                                      # bf16 writeback (half traffic)


def input_projection_pallas(x_rows, w_ih_t, a_rows, *, vmem_limit, use_buffered):
    m, e = x_rows.shape
    g4 = w_ih_t.shape[1]
    return pl.pallas_call(
        _proj_kernel,
        out_shape=jax.ShapeDtypeStruct((m, g4), jnp.bfloat16),
        grid_spec=pltpu.PrefetchScalarGridSpec(
            num_scalar_prefetch=0,
            grid=(m // a_rows,),
            in_specs=[
                pl.BlockSpec((a_rows, e), lambda r: (r, 0)),
                _resident_spec((e, g4), use_buffered),
            ],
            out_specs=pl.BlockSpec((a_rows, g4), lambda r: (r, 0)),
        ),
        compiler_params=pltpu.CompilerParams(
            dimension_semantics=("parallel",),
            vmem_limit_bytes=vmem_limit,
        ),
    )(x_rows, w_ih_t)


# -------------------- Kernel B: LSTM recurrence (time-major) --------------------
def _lstm_rec_kernel(xp_ref, whh_ref, bias_ref, out_ref, cN_ref, h_scr, c_scr, *,
                     hidden_pad, chunk, pad_start):
    t = pl.program_id(1)
    n_t = pl.num_programs(1)
    hp = hidden_pad

    @pl.when(t == 0)
    def _():  # zero initial state per batch block (matches torch.zeros in forward())
        h_scr[...] = jnp.zeros_like(h_scr)
        c_scr[...] = jnp.zeros_like(c_scr)

    w = whh_ref[...]                      # (Hp, 4Hp) bf16, resident
    b = bias_ref[...]                     # (1, 4Hp) f32, resident
    h = h_scr[...]                        # (Bblk, Hp) f32
    c = c_scr[...]

    if pad_start is not None:
        upd = (t < n_t - 1).astype(jnp.float32)   # 0.0 on the padded tail timesteps

    # Fully unrolled chunk loop: every timestep is one dense (Bblk, 4Hp) load
    # and one dense (Bblk, Hp) store (time-major blocks => no sublane masking).
    # TODO(synk): if bundle dumps show vreg spills at very large Hp, tile the
    # gate nonlinearities over 128-lane slices instead of materializing all
    # four gates at once.
    for j in range(chunk):
        xp = xp_ref[j].astype(jnp.float32)                       # (Bblk, 4Hp)
        gates = xp + b + jnp.dot(h.astype(jnp.bfloat16), w,
                                 preferred_element_type=jnp.float32)
        # PyTorch gate order i, f, g, o; 128-lane aligned static slices.
        i_g = jax.nn.sigmoid(gates[:, 0 * hp:1 * hp])
        f_g = jax.nn.sigmoid(gates[:, 1 * hp:2 * hp])
        g_g = jnp.tanh(gates[:, 2 * hp:3 * hp])
        o_g = jax.nn.sigmoid(gates[:, 3 * hp:4 * hp])
        c_new = f_g * c + i_g * g_g
        h_new = o_g * jnp.tanh(c_new)
        if pad_start is not None and j >= pad_start:
            c = c + upd * (c_new - c)        # freeze state on padded timesteps
            h = h + upd * (h_new - h)
        else:
            c, h = c_new, h_new
        out_ref[j] = h                                          # dense time-major store

    h_scr[...] = h
    c_scr[...] = c

    @pl.when(t == n_t - 1)
    def _():
        cN_ref[...] = c


def lstm_recurrence_pallas(xp_tm, w_hh_t, bias2d, *, chunk, batch_blk, pad_start,
                           vmem_limit, use_buffered):
    """xp_tm: (S_pad, Bp, 4Hp) bf16 time-major gate inputs (no bias yet).
    Returns (S_pad, Bp, Hp) f32 hidden states and (Bp, Hp) f32 final cell state."""
    s_pad, bp, g4 = xp_tm.shape
    hp = w_hh_t.shape[0]
    n_b = bp // batch_blk
    n_t = s_pad // chunk
    kernel = functools.partial(_lstm_rec_kernel, hidden_pad=hp, chunk=chunk,
                               pad_start=pad_start)
    grid_spec = pltpu.PrefetchScalarGridSpec(
        num_scalar_prefetch=0,
        grid=(n_b, n_t),                              # (parallel batch, sequential time)
        in_specs=[
            pl.BlockSpec((chunk, batch_blk, g4), lambda b, t: (t, b, 0)),
            _resident_spec((hp, g4), use_buffered),   # W_hh^T resident
            _resident_spec((1, g4), use_buffered),    # bias resident
        ],
        out_specs=[
            pl.BlockSpec((chunk, batch_blk, hp), lambda b, t: (t, b, 0)),
            pl.BlockSpec((batch_blk, hp), lambda b, t: (b, 0)),
        ],
        scratch_shapes=[
            pltpu.VMEM((batch_blk, hp), jnp.float32),   # h state (persists over time axis)
            pltpu.VMEM((batch_blk, hp), jnp.float32),   # c state
        ],
    )
    return pl.pallas_call(
        kernel,
        out_shape=(jax.ShapeDtypeStruct((s_pad, bp, hp), jnp.float32),
                   jax.ShapeDtypeStruct((bp, hp), jnp.float32)),
        grid_spec=grid_spec,
        compiler_params=pltpu.CompilerParams(
            dimension_semantics=("parallel", "arbitrary"),
            vmem_limit_bytes=vmem_limit,
        ),
    )(xp_tm, w_hh_t, bias2d)


# -------------------- Encoder module (params + wrapper) --------------------
class EncoderPallas:
    """type_='LSTM', num_layers=1, bidirectional=False, batch_first=True."""

    def __init__(self, key, input_dim, embed_dim, hidden_dim):
        self.input_dim = input_dim
        self.embed_dim = embed_dim
        self.hidden_dim = hidden_dim
        k_emb, k_wih, k_whh, k_bih, k_bhh = jax.random.split(key, 5)

        # torch.nn.Embedding default init: N(0, 1)
        self.embedding = jax.random.normal(
            k_emb, (input_dim, embed_dim), dtype=jnp.float32)

        # torch.nn.LSTM default init: U(-1/sqrt(H), 1/sqrt(H))
        bound = 1.0 / jnp.sqrt(jnp.float32(hidden_dim))
        self.w_ih = jax.random.uniform(
            k_wih, (4 * hidden_dim, embed_dim), jnp.float32, -bound, bound)
        self.w_hh = jax.random.uniform(
            k_whh, (4 * hidden_dim, hidden_dim), jnp.float32, -bound, bound)
        self.b_ih = jax.random.uniform(
            k_bih, (4 * hidden_dim,), jnp.float32, -bound, bound)
        self.b_hh = jax.random.uniform(
            k_bhh, (4 * hidden_dim,), jnp.float32, -bound, bound)

    def __call__(self, input_tensor):
        """input_tensor: (batch, seq) int32 token ids.
        Returns (outputs (B,S,H), (h_n (1,B,H), c_n (1,B,H)))."""
        B, S = input_tensor.shape
        E, H = self.embed_dim, self.hidden_dim
        Hp = _round_up(H, 128)            # lane-aligned per-gate width
        G4 = 4 * Hp
        Bp = _round_up(B, 8)              # sublane-aligned batch
        batch_blk = _choose_batch_block(Bp)

        cap = _vmem_capacity_bytes()
        vmem_limit = int(cap * 0.9)
        budget = int(cap * 0.6)           # headroom for Mosaic internals / fallback 2x buffers

        chunk = _choose_time_chunk(S, batch_blk, Hp, budget)
        S_pad = _round_up(S, chunk)
        pad_start = (S % chunk) if S_pad != S else None

        # ---- glue: ids -> padded time-major bf16 embeddings (only the tiny
        #      int32 id matrix is transposed on the host side) ----
        ids = input_tensor.astype(jnp.int32).T                       # (S, B)
        ids = jnp.pad(ids, ((0, S_pad - S), (0, Bp - B)))            # padding uses id 0
        emb_tm = jnp.take(self.embedding.astype(jnp.bfloat16), ids, axis=0)  # (S_pad,Bp,E) bf16

        # ---- per-gate zero padding of weights / bias to Hp (exact) ----
        w_ih_p = _pad_gate_rows(self.w_ih, H, Hp)                    # (4Hp, E)
        w_hh_p = _pad_gate_rows(self.w_hh, H, Hp)                    # (4Hp, H)
        w_hh_p = jnp.pad(w_hh_p, ((0, 0), (0, Hp - H)))              # (4Hp, Hp)
        bias_p = _pad_gate_vec(self.b_ih + self.b_hh, H, Hp)         # (4Hp,)

        w_ih_t = w_ih_p.T.astype(jnp.bfloat16)                       # (E, 4Hp)
        w_hh_t = w_hh_p.T.astype(jnp.bfloat16)                       # (Hp, 4Hp)
        bias2d = bias_p[None, :].astype(jnp.float32)                 # (1, 4Hp)

        x_rows = emb_tm.reshape(S_pad * Bp, E)                       # free reshape
        n_chunks = S_pad // chunk
        a_rows = _choose_a_rows(n_chunks, chunk * Bp, E, G4, budget)

        def run(use_buffered):
            # kernel A: relu(emb) @ W_ih^T for ALL timesteps (time-parallel, bf16 out)
            xp_rows = input_projection_pallas(
                x_rows, w_ih_t, a_rows,
                vmem_limit=vmem_limit, use_buffered=use_buffered)
            xp_tm = xp_rows.reshape(S_pad, Bp, G4)                   # free reshape
            # kernel B: sequential LSTM recurrence over time (time-major blocks)
            return lstm_recurrence_pallas(
                xp_tm, w_hh_t, bias2d, chunk=chunk, batch_blk=batch_blk,
                pad_start=pad_start, vmem_limit=vmem_limit,
                use_buffered=use_buffered)

        try:
            out_tm, c_last = run(True)
        except Exception:
            # pipeline_mode=pl.Buffered(1) not supported -> default double buffering.
            out_tm, c_last = run(False)

        # ---- back to the batch_first public layout (one XLA transpose) ----
        outputs = jnp.transpose(out_tm[:S, :B, :H], (1, 0, 2))       # (B, S, H)
        h_n = out_tm[S - 1, :B, :H][None]                            # (1, B, H)
        c_n = c_last[:B, :H][None]                                   # (1, B, H)
        return outputs, (h_n, c_n)


# -------------------- pure-JAX reference for sanity --------------------
def _reference(enc, ids, kernel_numerics=False):
    """Reference LSTM.  kernel_numerics=True models the kernel's bf16 MXU
    inputs and bf16 x_proj storage (f32 accumulation / f32 state); False is
    the exact f32 module math."""
    def cast(a):
        return a.astype(jnp.bfloat16).astype(jnp.float32) if kernel_numerics else a

    emb = jnp.maximum(jnp.take(cast(enc.embedding), ids, axis=0), 0.0)   # (B,S,E)
    B, S, _ = emb.shape
    H = enc.hidden_dim
    w_ih_t = cast(enc.w_ih.T)
    w_hh_t = cast(enc.w_hh.T)
    bias = enc.b_ih + enc.b_hh
    xp = cast(jnp.einsum('bse,eg->bsg', cast(emb), w_ih_t))              # bf16 x_proj storage
    h = jnp.zeros((B, H), jnp.float32)
    c = jnp.zeros((B, H), jnp.float32)
    outs = []
    for t in range(S):
        g = xp[:, t] + bias + cast(h) @ w_hh_t
        i = jax.nn.sigmoid(g[:, :H])
        f = jax.nn.sigmoid(g[:, H:2 * H])
        gg = jnp.tanh(g[:, 2 * H:3 * H])
        o = jax.nn.sigmoid(g[:, 3 * H:])
        c = f * c + i * gg
        h = o * jnp.tanh(c)
        outs.append(h)
    return jnp.stack(outs, axis=1), h[None], c[None]


if __name__ == "__main__":
    # Small shapes: batch=2, seq=8, vocab=16, embed_dim=32, hidden_dim=32
    B, S, V, E, H = 2, 8, 16, 32, 32
    key = jax.random.PRNGKey(0)
    k_param, k_ids = jax.random.split(key)

    enc = EncoderPallas(k_param, input_dim=V, embed_dim=E, hidden_dim=H)
    input_tensor = jax.random.randint(k_ids, (B, S), 0, V, dtype=jnp.int32)

    outputs, (h_n, c_n) = enc(input_tensor)
    outputs = jax.block_until_ready(outputs)
    h_n = jax.block_until_ready(h_n)
    c_n = jax.block_until_ready(c_n)

    assert outputs.shape == (B, S, H)
    assert h_n.shape == (1, B, H) and c_n.shape == (1, B, H)

    # Tight check against a reference that models the kernel's bf16 numerics.
    ref_out, ref_h, ref_c = _reference(enc, input_tensor, kernel_numerics=True)
    assert jnp.allclose(outputs, ref_out, atol=2e-3)
    assert jnp.allclose(h_n, ref_h, atol=2e-3)
    assert jnp.allclose(c_n, ref_c, atol=2e-3)

    # Loose check against the exact f32 module semantics.
    f32_out, f32_h, f32_c = _reference(enc, input_tensor, kernel_numerics=False)
    assert jnp.allclose(outputs, f32_out, atol=5e-2, rtol=5e-2)
    assert jnp.allclose(h_n, f32_h, atol=5e-2, rtol=5e-2)
    assert jnp.allclose(c_n, f32_c, atol=5e-2, rtol=5e-2)

    print("KERNEL_OK")
</pallas_src>

<mosaic_0001>
module attributes {stable_mosaic.version = 11 : i64} {
  func.func @_proj_kernel(%arg0: i32, %arg1: memref<64x32xbf16, #tpu.memory_space<vmem>>, %arg2: memref<32x512xbf16, #tpu.memory_space<vmem>>, %arg3: memref<64x512xbf16, #tpu.memory_space<vmem>>) attributes {dimension_semantics = [#tpu.dimension_semantics<parallel>], iteration_bounds = array<i64: 1>, scalar_prefetch = 0 : i64, scratch_operands = 0 : i64, tpu.core_type = #tpu.core_type<tc>, window_params = [{transform_indices = @transform_0, window_bounds = array<i64: 64, 32>}, {pipeline_mode = #tpu.pipeline_mode<synchronous>, transform_indices = @transform_1, window_bounds = array<i64: 32, 512>}, {transform_indices = @transform_2, window_bounds = array<i64: 64, 512>}]} {
    %c0 = arith.constant 0 : index
    %c0_0 = arith.constant 0 : index
    %0 = vector.load %arg1[%c0, %c0_0] : memref<64x32xbf16, #tpu.memory_space<vmem>>, vector<64x32xbf16>
    %cst = arith.constant 0.000000e+00 : bf16
    %1 = vector.broadcast %cst : bf16 to vector<64x32xbf16>
    %2 = arith.maximumf %0, %1 : vector<64x32xbf16>
    %c0_1 = arith.constant 0 : index
    %c0_2 = arith.constant 0 : index
    %3 = vector.load %arg2[%c0_1, %c0_2] : memref<32x512xbf16, #tpu.memory_space<vmem>>, vector<32x512xbf16>
    %cst_3 = arith.constant dense<0.000000e+00> : vector<64x512xf32>
    %4 = tpu.matmul %2, %3, %cst_3 {dimension_numbers = #tpu.dot_dimension_numbers<[1], [0], [0], [1], [0, 0, 1, 1], [], []>} : vector<64x32xbf16>, vector<32x512xbf16>, vector<64x512xf32> -> vector<64x512xf32>
    %5 = arith.truncf %4 : vector<64x512xf32> to vector<64x512xbf16>
    %c0_4 = arith.constant 0 : index
    %c0_5 = arith.constant 0 : index
    %6 = vector.load %arg3[%c0_4, %c0_5] : memref<64x512xbf16, #tpu.memory_space<vmem>>, vector<64x512xbf16>
    tpu.vector_store %arg3[%c0_4, %c0_5], %5 {strides = array<i32>} : memref<64x512xbf16, #tpu.memory_space<vmem>>, vector<64x512xbf16>,
    return
  }
  func.func @transform_0(%arg0: i32) -> (i32, i32) {
    %c0_i32 = arith.constant 0 : i32
    %c0_i32_0 = arith.constant 0 : i32
    return %arg0, %c0_i32 : i32, i32
  }
  func.func @transform_1(%arg0: i32) -> (i32, i32) {
    %c0_i32 = arith.constant 0 : i32
    %c0_i32_0 = arith.constant 0 : i32
    %c0_i32_1 = arith.constant 0 : i32
    return %c0_i32, %c0_i32_0 : i32, i32
  }
  func.func @transform_2(%arg0: i32) -> (i32, i32) {
    %c0_i32 = arith.constant 0 : i32
    %c0_i32_0 = arith.constant 0 : i32
    return %arg0, %c0_i32 : i32, i32
  }
}

module attributes {stable_mosaic.version = 11 : i64} {
  func.func @_proj_kernel(%arg0: i32, %arg1: memref<64x32xbf16, #tpu.memory_space<vmem>>, %arg2: memref<32x512xbf16, #tpu.memory_space<vmem>>, %arg3: memref<64x512xbf16, #tpu.memory_space<vmem>>) attributes {dimension_semantics = [#tpu.dimension_semantics<parallel>], iteration_bounds = array<i64: 1>, scalar_prefetch = 0 : i64, scratch_operands = 0 : i64, tpu.core_type = #tpu.core_type<tc>, window_params = [{transform_indices = @transform_0, window_bounds = array<i64: 64, 32>}, {pipeline_mode = #tpu.pipeline_mode<synchronous>, transform_indices = @transform_1, window_bounds = array<i64: 32, 512>}, {transform_indices = @transform_2, window_bounds = array<i64: 64, 512>}]} {
    %c0 = arith.constant 0 : index
    %c0_0 = arith.constant 0 : index
    %0 = vector.load %arg1[%c0, %c0_0] : memref<64x32xbf16, #tpu.memory_space<vmem>>, vector<64x32xbf16>
    %cst = arith.constant 0.000000e+00 : bf16
    %1 = vector.broadcast %cst : bf16 to vector<64x32xbf16>
    %2 = arith.maximumf %0, %1 : vector<64x32xbf16>
    %c0_1 = arith.constant 0 : index
    %c0_2 = arith.constant 0 : index
    %3 = vector.load %arg2[%c0_1, %c0_2] : memref<32x512xbf16, #tpu.memory_space<vmem>>, vector<32x512xbf16>
    %cst_3 = arith.constant dense<0.000000e+00> : vector<64x512xf32>
    %4 = tpu.matmul %2, %3, %cst_3 {dimension_numbers = #tpu.dot_dimension_numbers<[1], [0], [0], [1], [0, 0, 1, 1], [], []>} : vector<64x32xbf16>, vector<32x512xbf16>, vector<64x512xf32> -> vector<64x512xf32>
    %5 = arith.truncf %4 : vector<64x512xf32> to vector<64x512xbf16>
    %c0_4 = arith.constant 0 : index
    %c0_5 = arith.constant 0 : index
    %6 = vector.load %arg3[%c0_4, %c0_5] : memref<64x512xbf16, #tpu.memory_space<vmem>>, vector<64x512xbf16>
    tpu.vector_store %arg3[%c0_4, %c0_5], %5 {strides = array<i32>} : memref<64x512xbf16, #tpu.memory_space<vmem>>, vector<64x512xbf16>,
    return
  }
  func.func @transform_0(%arg0: i32) -> (i32, i32) {
    %c0_i32 = arith.constant 0 : i32
    %c0_i32_0 = arith.constant 0 : i32
    return %arg0, %c0_i32 : i32, i32
  }
  func.func @transform_1(%arg0: i32) -> (i32, i32) {
    %c0_i32 = arith.constant 0 : i32
    %c0_i32_0 = arith.constant 0 : i32
    %c0_i32_1 = arith.constant 0 : i32
    return %c0_i32, %c0_i32_0 : i32, i32
  }
  func.func @transform_2(%arg0: i32) -> (i32, i32) {
    %c0_i32 = arith.constant 0 : i32
    %c0_i32_0 = arith.constant 0 : i32
    return %arg0, %c0_i32 : i32, i32
  }
}

</mosaic_0001>

<llo_original>
// kernel: tpu_custom_call.1
$region0: #{tpu_custom_call.1}
  #allocation0 [shape = 'u32[]', space=smem, size = 0x4, offset = 0x4, fixed_abs, tag = 'smem constant byte address 0x4 - core index']
  #allocation1 [shape = 'u32[144,128]{1,0:T(1,128)}', space=vmem, size = 0x12000, scoped, tag = 'internal scratch']
  %s0 = inlined_call_operand.vmem [shape: bf16[64,32], index: 0, kind: input, shape index: {}]
  %s1 = inlined_call_operand.hbm [shape: bf16[32,512], index: 1, kind: input, shape index: {}]
  %s2 = inlined_call_operand.hbm [shape: bf16[64,512], index: 2, kind: output, shape index: {}]
  %s3 = sld [smem:[#allocation0]]
  $region22: #{tpu_custom_call.1} parent=0
    _
  %s5 = ssub.s32 1, %s3
  %s6 = scalar_select 0, %s5, %s3
  $region1: #{tpu_custom_call.1} parent=0
    #allocation2 [shape = 'u8[32768]{0}', space=vmem, size = 0x8000, scoped, tag = 'input window, operand 1, single buffered']
    #allocation3 [shape = 's32[1]{0}', space=sflag, size = 0x4, scoped, tag = 'scoped memory for tpu_custom_call.1']
    #allocation4 [shape = 's32[1]{0}', space=sflag, size = 0x4, scoped, tag = 'scoped memory for tpu_custom_call.1']
    #allocation5 [shape = 'u8[65536]{0}', space=vmem, size = 0x10000, scoped, tag = 'output window, operand 0, single buffered']
    %7 = vsyncpa [#allocation3], 0
    %8 = vsyncpa [#allocation4], 0
    // Predicated region
    $region2: #{tpu_custom_call.1} parent=1 // pred_check
      _
    $region3: #{tpu_custom_call.1} parent=1 // pred_check_branch
      %10 = sbr.rel (0) target = $region5
    $region4: #{tpu_custom_call.1} parent=1 // pred_region
      _
    $region5: #{tpu_custom_call.1} parent=1 // pred_fallthru
      _
    // Predicated region
    $region6: #{tpu_custom_call.1} parent=1 // pred_check
      _
    $region7: #{tpu_custom_call.1} parent=1 // pred_check_branch
      %12 = sbr.rel (0) target = $region9
    $region8: #{tpu_custom_call.1} parent=1 // pred_region
      %s14 = ssub.s32 1024, 1024
      %15 = vsyncadd [#allocation3], %s14
      %s16 = sshll.u32 [#allocation2], 4
      %s17 = int_to_ptr.vmem [resolvable:$true] %s16
      %22 = dma.hbm_to_vmem [thread:$0]  %s1, 1024, %s17, [#allocation3], 256, 256, 16
    $region9: #{tpu_custom_call.1} parent=1 // pred_fallthru
      _
    // Predicated region
    $region10: #{tpu_custom_call.1} parent=1 // pred_check
      _
    $region11: #{tpu_custom_call.1} parent=1 // pred_check_branch
      %24 = sbr.rel (0) target = $region13
    $region12: #{tpu_custom_call.1} parent=1 // pred_region
      %25 = dma.done [#allocation3], 1024
    $region13: #{tpu_custom_call.1} parent=1 // pred_fallthru
      _
    %v27 = vld [vmem:[%s0] sm:$0xf]
    %v28 = vld [vmem:[%s0 + $0x4] sm:$0xf]
    %v29 = vld [vmem:[%s0 + $0x8] sm:$0xf]
    %v30 = vld [vmem:[%s0 + $0xc] sm:$0xf]
    %v31 = vld [vmem:[%s0 + $0x10] sm:$0xf]
    %v32 = vld [vmem:[%s0 + $0x14] sm:$0xf]
    %v33 = vld [vmem:[%s0 + $0x18] sm:$0xf]
    %v34 = vld [vmem:[%s0 + $0x1c] sm:$0xf]
    %v35 = vmax.bf16 %v27, 0
    %v36 = vmax.bf16 %v28, 0
    %v37 = vmax.bf16 %v29, 0
    %v38 = vmax.bf16 %v30, 0
    %v39 = vmax.bf16 %v31, 0
    %v40 = vmax.bf16 %v32, 0
    %v41 = vmax.bf16 %v33, 0
    %v42 = vmax.bf16 %v34, 0
    %v43 = vld [vmem:[#allocation2] sm:$0xff]
    %v44 = vld [vmem:[#allocation2 + $0x8] sm:$0xff]
    %v45 = vld [vmem:[#allocation2 + $0x10] sm:$0xff]
    %v46 = vld [vmem:[#allocation2 + $0x18] sm:$0xff]
    %v47 = vld [vmem:[#allocation2 + $0x20] sm:$0xff]
    %v48 = vld [vmem:[#allocation2 + $0x28] sm:$0xff]
    %v49 = vld [vmem:[#allocation2 + $0x30] sm:$0xff]
    %v50 = vld [vmem:[#allocation2 + $0x38] sm:$0xff]
    %v59 = vunpack.c.l.b16 %v35
    %v60 = vunpack.c.l.b16 %v36
    %v61 = vunpack.c.l.b16 %v37
    %v62 = vunpack.c.l.b16 %v38
    %v63 = vunpack.c.l.b16 %v39
    %v64 = vunpack.c.l.b16 %v40
    %v65 = vunpack.c.l.b16 %v41
    %v66 = vunpack.c.l.b16 %v42
    %v67 = vpack.c.b16 %v60, %v59
    %v68 = vpack.c.b16 %v62, %v61
    %v69 = vpack.c.b16 %v64, %v63
    %v70 = vpack.c.b16 %v66, %v65
    %v79 = vunpack.c.l.b16 %v43
    %v80 = vunpack.c.h.b16 %v43
    %v81 = vunpack.c.l.b16 %v44
    %v82 = vunpack.c.h.b16 %v44
    %v83 = vunpack.c.l.b16 %v45
    %v84 = vunpack.c.h.b16 %v45
    %v85 = vunpack.c.l.b16 %v46
    %v86 = vunpack.c.h.b16 %v46
    %v87 = vunpack.c.l.b16 %v47
    %v88 = vunpack.c.h.b16 %v47
    %v89 = vunpack.c.l.b16 %v48
    %v90 = vunpack.c.h.b16 %v48
    %v91 = vunpack.c.l.b16 %v49
    %v92 = vunpack.c.h.b16 %v49
    %v93 = vunpack.c.l.b16 %v50
    %v94 = vunpack.c.h.b16 %v50
    %v95 = vpack.c.b16 %v83, %v79
    %v96 = vpack.c.b16 %v84, %v80
    %v97 = vpack.c.b16 %v85, %v81
    %v98 = vpack.c.b16 %v86, %v82
    %v99 = vpack.c.b16 %v91, %v87
    %v100 = vpack.c.b16 %v92, %v88
    %v101 = vpack.c.b16 %v93, %v89
    %v102 = vpack.c.b16 %v94, %v90
    %vm111 = vcmask 261120
    %v113 = vsel %vm111, %v67, 0
    %v116 = vsel %vm111, %v68, 0
    %v119 = vsel %vm111, %v69, 0
    %v122 = vsel %vm111, %v70, 0
    %124 = vmatprep.subr.bf16.mxu0 %v96
    %125 = vmatpush1.bf16.msra.mxu0 %v95
    %126 = vmatprep.subr.bf16.mxu0 %v100
    %127 = vmatpush1.bf16.msra.mxu0 %v99
    %128 = vmatprep.subr.bf16.mxu0 0
    %129 = vmatpush1.bf16.msra.mxu0 0
    %130 = vmatprep.subr.bf16.mxu0 0
    %131 = vmatpush1.bf16.msra.mxu0 0
    %132 = vmatprep.subr.bf16.mxu0 0
    %133 = vmatpush1.bf16.msra.mxu0 0
    %134 = vmatprep.subr.bf16.mxu0 0
    %135 = vmatpush1.bf16.msra.mxu0 0
    %136 = vmatprep.subr.bf16.mxu0 0
    %137 = vmatpush1.bf16.msra.mxu0 0
    %138 = vmatprep.subr.bf16.mxu0 0
    %139 = vmatpush1.bf16.msra.mxu0 0
    %140 = vmatprep.subr.bf16.mxu0 0
    %141 = vmatpush1.bf16.msra.mxu0 0
    %142 = vmatprep.subr.bf16.mxu0 0
    %143 = vmatpush1.bf16.msra.mxu0 0
    %144 = vmatprep.subr.bf16.mxu0 0
    %145 = vmatpush1.bf16.msra.mxu0 0
    %146 = vmatprep.subr.bf16.mxu0 0
    %147 = vmatpush1.bf16.msra.mxu0 0
    %148 = vmatprep.subr.bf16.mxu0 0
    %149 = vmatpush1.bf16.msra.mxu0 0
    %150 = vmatprep.subr.bf16.mxu0 0
    %151 = vmatpush1.bf16.msra.mxu0 0
    %152 = vmatprep.subr.bf16.mxu0 0
    %153 = vmatpush1.bf16.msra.mxu0 0
    %154 = vmatprep.subr.bf16.mxu0 0
    %155 = vmatpush1.bf16.msra.mxu0 0
    %156 = vmatprep.mubr.bf16.mxu0 0
    %157 = vmatmul.mubr.bf16.gmra.mrb[0].mxu0 %v113
    %v158 = vpop.f32.mrb[0].mxu0
    %v159 = vadd.f32 0.0, %v158
    %v160 = vpop.f32.mrb[0].mxu0
    %v161 = vadd.f32 0.0, %v160
    %v162 = vpop.f32.mrb[0].mxu0
    %v163 = vadd.f32 0.0, %v162
    %v164 = vpop.f32.mrb[0].mxu0
    %v165 = vadd.f32 0.0, %v164
    %166 = vmatprep.mubr.bf16.mxu0 0
    %167 = vmatmul.mubr.bf16.gmra.mrb[0].mxu0 %v116
    %v168 = vpop.f32.mrb[0].mxu0
    %v169 = vadd.f32 0.0, %v168
    %v170 = vpop.f32.mrb[0].mxu0
    %v171 = vadd.f32 0.0, %v170
    %v172 = vpop.f32.mrb[0].mxu0
    %v173 = vadd.f32 0.0, %v172
    %v174 = vpop.f32.mrb[0].mxu0
    %v175 = vadd.f32 0.0, %v174
    %176 = vmatprep.mubr.bf16.mxu0 0
    %177 = vmatmul.mubr.bf16.gmra.mrb[0].mxu0 %v119
    %v178 = vpop.f32.mrb[0].mxu0
    %v179 = vadd.f32 0.0, %v178
    %v180 = vpop.f32.mrb[0].mxu0
    %v181 = vadd.f32 0.0, %v180
    %v182 = vpop.f32.mrb[0].mxu0
    %v183 = vadd.f32 0.0, %v182
    %v184 = vpop.f32.mrb[0].mxu0
    %v185 = vadd.f32 0.0, %v184
    %186 = vmatprep.mubr.bf16.mxu0 0
    %187 = vmatmul.mubr.bf16.gmra.mrb[0].mxu0 %v122
    %v188 = vpop.f32.mrb[0].mxu0
    %v189 = vadd.f32 0.0, %v188
    %v190 = vpop.f32.mrb[0].mxu0
    %v191 = vadd.f32 0.0, %v190
    %v192 = vpop.f32.mrb[0].mxu0
    %v193 = vadd.f32 0.0, %v192
    %v194 = vpop.f32.mrb[0].mxu0
    %v195 = vadd.f32 0.0, %v194
    %196 = vdwg.mxu0
    %197 = vmatprep.subr.bf16.mxu0 %v98
    %198 = vmatpush1.bf16.msra.mxu0 %v97
    %199 = vmatprep.subr.bf16.mxu0 %v102
    %200 = vmatpush1.bf16.msra.mxu0 %v101
    %201 = vmatprep.subr.bf16.mxu0 0
    %202 = vmatpush1.bf16.msra.mxu0 0
    %203 = vmatprep.subr.bf16.mxu0 0
    %204 = vmatpush1.bf16.msra.mxu0 0
    %205 = vmatprep.subr.bf16.mxu0 0
    %206 = vmatpush1.bf16.msra.mxu0 0
    %207 = vmatprep.subr.bf16.mxu0 0
    %208 = vmatpush1.bf16.msra.mxu0 0
    %209 = vmatprep.subr.bf16.mxu0 0
    %210 = vmatpush1.bf16.msra.mxu0 0
    %211 = vmatprep.subr.bf16.mxu0 0
    %212 = vmatpush1.bf16.msra.mxu0 0
    %213 = vmatprep.subr.bf16.mxu0 0
    %214 = vmatpush1.bf16.msra.mxu0 0
    %215 = vmatprep.subr.bf16.mxu0 0
    %216 = vmatpush1.bf16.msra.mxu0 0
    %217 = vmatprep.subr.bf16.mxu0 0
    %218 = vmatpush1.bf16.msra.mxu0 0
    %219 = vmatprep.subr.bf16.mxu0 0
    %220 = vmatpush1.bf16.msra.mxu0 0
    %221 = vmatprep.subr.bf16.mxu0 0
    %222 = vmatpush1.bf16.msra.mxu0 0
    %223 = vmatprep.subr.bf16.mxu0 0
    %224 = vmatpush1.bf16.msra.mxu0 0
    %225 = vmatprep.subr.bf16.mxu0 0
    %226 = vmatpush1.bf16.msra.mxu0 0
    %227 = vmatprep.subr.bf16.mxu0 0
    %228 = vmatpush1.bf16.msra.mxu0 0
    %229 = vmatprep.mubr.bf16.mxu0 0
    %230 = vmatmul.mubr.bf16.gmra.mrb[0].mxu0 %v113
    %v231 = vpop.f32.mrb[0].mxu0
    %v232 = vadd.f32 0.0, %v231
    %v233 = vpop.f32.mrb[0].mxu0
    %v234 = vadd.f32 0.0, %v233
    %v235 = vpop.f32.mrb[0].mxu0
    %v236 = vadd.f32 0.0, %v235
    %v237 = vpop.f32.mrb[0].mxu0
    %v238 = vadd.f32 0.0, %v237
    %239 = vmatprep.mubr.bf16.mxu0 0
    %240 = vmatmul.mubr.bf16.gmra.mrb[0].mxu0 %v116
    %v241 = vpop.f32.mrb[0].mxu0
    %v242 = vadd.f32 0.0, %v241
    %v243 = vpop.f32.mrb[0].mxu0
    %v244 = vadd.f32 0.0, %v243
    %v245 = vpop.f32.mrb[0].mxu0
    %v246 = vadd.f32 0.0, %v245
    %v247 = vpop.f32.mrb[0].mxu0
    %v248 = vadd.f32 0.0, %v247
    %249 = vmatprep.mubr.bf16.mxu0 0
    %250 = vmatmul.mubr.bf16.gmra.mrb[0].mxu0 %v119
    %v251 = vpop.f32.mrb[0].mxu0
    %v252 = vadd.f32 0.0, %v251
    %v253 = vpop.f32.mrb[0].mxu0
    %v254 = vadd.f32 0.0, %v253
    %v255 = vpop.f32.mrb[0].mxu0
    %v256 = vadd.f32 0.0, %v255
    %v257 = vpop.f32.mrb[0].mxu0
    %v258 = vadd.f32 0.0, %v257
    %259 = vmatprep.mubr.bf16.mxu0 0
    %260 = vmatmul.mubr.bf16.gmra.mrb[0].mxu0 %v122
    %v261 = vpop.f32.mrb[0].mxu0
    %v262 = vadd.f32 0.0, %v261
    %v263 = vpop.f32.mrb[0].mxu0
    %v264 = vadd.f32 0.0, %v263
    %v265 = vpop.f32.mrb[0].mxu0
    %v266 = vadd.f32 0.0, %v265
    %v267 = vpop.f32.mrb[0].mxu0
    %v268 = vadd.f32 0.0, %v267
    %269 = vdwg.mxu0
    %v270 = vpack.c.bf16 %v163, %v159
    %v271 = vpack.c.bf16 %v165, %v161
    %v272 = vpack.c.bf16 %v236, %v232
    %v273 = vpack.c.bf16 %v238, %v234
    %v274 = vpack.c.bf16 %v173, %v169
    %v275 = vpack.c.bf16 %v175, %v171
    %v276 = vpack.c.bf16 %v246, %v242
    %v277 = vpack.c.bf16 %v248, %v244
    %v278 = vpack.c.bf16 %v183, %v179
    %v279 = vpack.c.bf16 %v185, %v181
    %v280 = vpack.c.bf16 %v256, %v252
    %v281 = vpack.c.bf16 %v258, %v254
    %v282 = vpack.c.bf16 %v193, %v189
    %v283 = vpack.c.bf16 %v195, %v191
    %v284 = vpack.c.bf16 %v266, %v262
    %v285 = vpack.c.bf16 %v268, %v264
    %v302 = vunpack.c.l.b16 %v270
    %v303 = vunpack.c.l.b16 %v271
    %v304 = vunpack.c.l.b16 %v272
    %v305 = vunpack.c.l.b16 %v273
    %v306 = vunpack.c.h.b16 %v270
    %v307 = vunpack.c.h.b16 %v271
    %v308 = vunpack.c.h.b16 %v272
    %v309 = vunpack.c.h.b16 %v273
    %v310 = vunpack.c.l.b16 %v274
    %v311 = vunpack.c.l.b16 %v275
    %v312 = vunpack.c.l.b16 %v276
    %v313 = vunpack.c.l.b16 %v277
    %v314 = vunpack.c.h.b16 %v274
    %v315 = vunpack.c.h.b16 %v275
    %v316 = vunpack.c.h.b16 %v276
    %v317 = vunpack.c.h.b16 %v277
    %v318 = vunpack.c.l.b16 %v278
    %v319 = vunpack.c.l.b16 %v279
    %v320 = vunpack.c.l.b16 %v280
    %v321 = vunpack.c.l.b16 %v281
    %v322 = vunpack.c.h.b16 %v278
    %v323 = vunpack.c.h.b16 %v279
    %v324 = vunpack.c.h.b16 %v280
    %v325 = vunpack.c.h.b16 %v281
    %v326 = vunpack.c.l.b16 %v282
    %v327 = vunpack.c.l.b16 %v283
    %v328 = vunpack.c.l.b16 %v284
    %v329 = vunpack.c.l.b16 %v285
    %v330 = vunpack.c.h.b16 %v282
    %v331 = vunpack.c.h.b16 %v283
    %v332 = vunpack.c.h.b16 %v284
    %v333 = vunpack.c.h.b16 %v285
    %v334 = vpack.c.b16 %v303, %v302
    %v335 = vpack.c.b16 %v305, %v304
    %v336 = vpack.c.b16 %v307, %v306
    %v337 = vpack.c.b16 %v309, %v308
    %v338 = vpack.c.b16 %v311, %v310
    %v339 = vpack.c.b16 %v313, %v312
    %v340 = vpack.c.b16 %v315, %v314
    %v341 = vpack.c.b16 %v317, %v316
    %v342 = vpack.c.b16 %v319, %v318
    %v343 = vpack.c.b16 %v321, %v320
    %v344 = vpack.c.b16 %v323, %v322
    %v345 = vpack.c.b16 %v325, %v324
    %v346 = vpack.c.b16 %v327, %v326
    %v347 = vpack.c.b16 %v329, %v328
    %v348 = vpack.c.b16 %v331, %v330
    %v349 = vpack.c.b16 %v333, %v332
    %366 = vst [vmem:[#allocation5] sm:$0xff] %v334
    %367 = vst [vmem:[#allocation5 + $0x8] sm:$0xff] %v335
    %368 = vst [vmem:[#allocation5 + $0x10] sm:$0xff] %v336
    %369 = vst [vmem:[#allocation5 + $0x18] sm:$0xff] %v337
    %370 = vst [vmem:[#allocation5 + $0x20] sm:$0xff] %v338
    %371 = vst [vmem:[#allocation5 + $0x28] sm:$0xff] %v339
    %372 = vst [vmem:[#allocation5 + $0x30] sm:$0xff] %v340
    %373 = vst [vmem:[#allocation5 + $0x38] sm:$0xff] %v341
    %374 = vst [vmem:[#allocation5 + $0x40] sm:$0xff] %v342
    %375 = vst [vmem:[#allocation5 + $0x48] sm:$0xff] %v343
    %376 = vst [vmem:[#allocation5 + $0x50] sm:$0xff] %v344
    %377 = vst [vmem:[#allocation5 + $0x58] sm:$0xff] %v345
    %378 = vst [vmem:[#allocation5 + $0x60] sm:$0xff] %v346
    %379 = vst [vmem:[#allocation5 + $0x68] sm:$0xff] %v347
    %380 = vst [vmem:[#allocation5 + $0x70] sm:$0xff] %v348
    %381 = vst [vmem:[#allocation5 + $0x78] sm:$0xff] %v349
    // Predicated region
    $region14: #{tpu_custom_call.1} parent=1 // pred_check
      _
    $region15: #{tpu_custom_call.1} parent=1 // pred_check_branch
      %383 = sbr.rel (0) target = $region17
    $region16: #{tpu_custom_call.1} parent=1 // pred_region
      %s385 = ssub.s32 2048, 2048
      %386 = vsyncadd [#allocation4], %s385
      %s387 = sshll.u32 [#allocation5], 4
      %s388 = int_to_ptr.vmem [resolvable:$true] %s387
      %393 = dma.vmem_to_hbm [thread:$0]  %s388, 2048, %s2, [#allocation4], 256, 256, 16
    $region17: #{tpu_custom_call.1} parent=1 // pred_fallthru
      _
    // Predicated region
    $region18: #{tpu_custom_call.1} parent=1 // pred_check
      _
    $region19: #{tpu_custom_call.1} parent=1 // pred_check_branch
      %395 = sbr.rel (0) target = $region21
    $region20: #{tpu_custom_call.1} parent=1 // pred_region
      %396 = dma.done [#allocation4], 2048
    $region21: #{tpu_custom_call.1} parent=1 // pred_fallthru
      _
    %397 = vsyncpa [#allocation3], 1
    %398 = vsyncpa [#allocation4], 1

// kernel: tpu_custom_call.1
$region0: #{tpu_custom_call.1}
  #allocation0 [shape = 'u32[]', space=smem, size = 0x4, offset = 0x4, fixed_abs, tag = 'smem constant byte address 0x4 - core index']
  #allocation1 [shape = 'u32[144,128]{1,0:T(1,128)}', space=vmem, size = 0x12000, scoped, tag = 'internal scratch']
  %s0 = inlined_call_operand.vmem [shape: bf16[64,32], index: 0, kind: input, shape index: {}]
  %s1 = inlined_call_operand.hbm [shape: bf16[32,512], index: 1, kind: input, shape index: {}]
  %s2 = inlined_call_operand.hbm [shape: bf16[64,512], index: 2, kind: output, shape index: {}]
  %s3 = sld [smem:[#allocation0]]
  $region22: #{tpu_custom_call.1} parent=0
    _
  %s5 = ssub.s32 1, %s3
  %s6 = scalar_select 0, %s5, %s3
  $region1: #{tpu_custom_call.1} parent=0
    #allocation2 [shape = 'u8[32768]{0}', space=vmem, size = 0x8000, scoped, tag = 'input window, operand 1, single buffered']
    #allocation3 [shape = 's32[1]{0}', space=sflag, size = 0x4, scoped, tag = 'scoped memory for tpu_custom_call.1']
    #allocation4 [shape = 's32[1]{0}', space=sflag, size = 0x4, scoped, tag = 'scoped memory for tpu_custom_call.1']
    #allocation5 [shape = 'u8[65536]{0}', space=vmem, size = 0x10000, scoped, tag = 'output window, operand 0, single buffered']
    %7 = vsyncpa [#allocation3], 0
    %8 = vsyncpa [#allocation4], 0
    // Predicated region
    $region2: #{tpu_custom_call.1} parent=1 // pred_check
      _
    $region3: #{tpu_custom_call.1} parent=1 // pred_check_branch
      %10 = sbr.rel (0) target = $region5
    $region4: #{tpu_custom_call.1} parent=1 // pred_region
      _
    $region5: #{tpu_custom_call.1} parent=1 // pred_fallthru
      _
    // Predicated region
    $region6: #{tpu_custom_call.1} parent=1 // pred_check
      _
    $region7: #{tpu_custom_call.1} parent=1 // pred_check_branch
      %12 = sbr.rel (0) target = $region9
    $region8: #{tpu_custom_call.1} parent=1 // pred_region
      %s14 = ssub.s32 1024, 1024
      %15 = vsyncadd [#allocation3], %s14
      %s16 = sshll.u32 [#allocation2], 4
      %s17 = int_to_ptr.vmem [resolvable:$true] %s16
      %22 = dma.hbm_to_vmem [thread:$0]  %s1, 1024, %s17, [#allocation3], 256, 256, 16
    $region9: #{tpu_custom_call.1} parent=1 // pred_fallthru
      _
    // Predicated region
    $region10: #{tpu_custom_call.1} parent=1 // pred_check
      _
    $region11: #{tpu_custom_call.1} parent=1 // pred_check_branch
      %24 = sbr.rel (0) target = $region13
    $region12: #{tpu_custom_call.1} parent=1 // pred_region
      %25 = dma.done [#allocation3], 1024
    $region13: #{tpu_custom_call.1} parent=1 // pred_fallthru
      _
    %v27 = vld [vmem:[%s0] sm:$0xf]
    %v28 = vld [vmem:[%s0 + $0x4] sm:$0xf]
    %v29 = vld [vmem:[%s0 + $0x8] sm:$0xf]
    %v30 = vld [vmem:[%s0 + $0xc] sm:$0xf]
    %v31 = vld [vmem:[%s0 + $0x10] sm:$0xf]
    %v32 = vld [vmem:[%s0 + $0x14] sm:$0xf]
    %v33 = vld [vmem:[%s0 + $0x18] sm:$0xf]
    %v34 = vld [vmem:[%s0 + $0x1c] sm:$0xf]
    %v35 = vmax.bf16 %v27, 0
    %v36 = vmax.bf16 %v28, 0
    %v37 = vmax.bf16 %v29, 0
    %v38 = vmax.bf16 %v30, 0
    %v39 = vmax.bf16 %v31, 0
    %v40 = vmax.bf16 %v32, 0
    %v41 = vmax.bf16 %v33, 0
    %v42 = vmax.bf16 %v34, 0
    %v43 = vld [vmem:[#allocation2] sm:$0xff]
    %v44 = vld [vmem:[#allocation2 + $0x8] sm:$0xff]
    %v45 = vld [vmem:[#allocation2 + $0x10] sm:$0xff]
    %v46 = vld [vmem:[#allocation2 + $0x18] sm:$0xff]
    %v47 = vld [vmem:[#allocation2 + $0x20] sm:$0xff]
    %v48 = vld [vmem:[#allocation2 + $0x28] sm:$0xff]
    %v49 = vld [vmem:[#allocation2 + $0x30] sm:$0xff]
    %v50 = vld [vmem:[#allocation2 + $0x38] sm:$0xff]
    %v59 = vunpack.c.l.b16 %v35
    %v60 = vunpack.c.l.b16 %v36
    %v61 = vunpack.c.l.b16 %v37
    %v62 = vunpack.c.l.b16 %v38
    %v63 = vunpack.c.l.b16 %v39
    %v64 = vunpack.c.l.b16 %v40
    %v65 = vunpack.c.l.b16 %v41
    %v66 = vunpack.c.l.b16 %v42
    %v67 = vpack.c.b16 %v60, %v59
    %v68 = vpack.c.b16 %v62, %v61
    %v69 = vpack.c.b16 %v64, %v63
    %v70 = vpack.c.b16 %v66, %v65
    %v79 = vunpack.c.l.b16 %v43
    %v80 = vunpack.c.h.b16 %v43
    %v81 = vunpack.c.l.b16 %v44
    %v82 = vunpack.c.h.b16 %v44
    %v83 = vunpack.c.l.b16 %v45
    %v84 = vunpack.c.h.b16 %v45
    %v85 = vunpack.c.l.b16 %v46
    %v86 = vunpack.c.h.b16 %v46
    %v87 = vunpack.c.l.b16 %v47
    %v88 = vunpack.c.h.b16 %v47
    %v89 = vunpack.c.l.b16 %v48
    %v90 = vunpack.c.h.b16 %v48
    %v91 = vunpack.c.l.b16 %v49
    %v92 = vunpack.c.h.b16 %v49
    %v93 = vunpack.c.l.b16 %v50
    %v94 = vunpack.c.h.b16 %v50
    %v95 = vpack.c.b16 %v83, %v79
    %v96 = vpack.c.b16 %v84, %v80
    %v97 = vpack.c.b16 %v85, %v81
    %v98 = vpack.c.b16 %v86, %v82
    %v99 = vpack.c.b16 %v91, %v87
    %v100 = vpack.c.b16 %v92, %v88
    %v101 = vpack.c.b16 %v93, %v89
    %v102 = vpack.c.b16 %v94, %v90
    %vm111 = vcmask 261120
    %v113 = vsel %vm111, %v67, 0
    %v116 = vsel %vm111, %v68, 0
    %v119 = vsel %vm111, %v69, 0
    %v122 = vsel %vm111, %v70, 0
    %124 = vmatprep.subr.bf16.mxu0 %v96
    %125 = vmatpush1.bf16.msra.mxu0 %v95
    %126 = vmatprep.subr.bf16.mxu0 %v100
    %127 = vmatpush1.bf16.msra.mxu0 %v99
    %128 = vmatprep.subr.bf16.mxu0 0
    %129 = vmatpush1.bf16.msra.mxu0 0
    %130 = vmatprep.subr.bf16.mxu0 0
    %131 = vmatpush1.bf16.msra.mxu0 0
    %132 = vmatprep.subr.bf16.mxu0 0
    %133 = vmatpush1.bf16.msra.mxu0 0
    %134 = vmatprep.subr.bf16.mxu0 0
    %135 = vmatpush1.bf16.msra.mxu0 0
    %136 = vmatprep.subr.bf16.mxu0 0
    %137 = vmatpush1.bf16.msra.mxu0 0
    %138 = vmatprep.subr.bf16.mxu0 0
    %139 = vmatpush1.bf16.msra.mxu0 0
    %140 = vmatprep.subr.bf16.mxu0 0
    %141 = vmatpush1.bf16.msra.mxu0 0
    %142 = vmatprep.subr.bf16.mxu0 0
    %143 = vmatpush1.bf16.msra.mxu0 0
    %144 = vmatprep.subr.bf16.mxu0 0
    %145 = vmatpush1.bf16.msra.mxu0 0
    %146 = vmatprep.subr.bf16.mxu0 0
    %147 = vmatpush1.bf16.msra.mxu0 0
    %148 = vmatprep.subr.bf16.mxu0 0
    %149 = vmatpush1.bf16.msra.mxu0 0
    %150 = vmatprep.subr.bf16.mxu0 0
    %151 = vmatpush1.bf16.msra.mxu0 0
    %152 = vmatprep.subr.bf16.mxu0 0
    %153 = vmatpush1.bf16.msra.mxu0 0
    %154 = vmatprep.subr.bf16.mxu0 0
    %155 = vmatpush1.bf16.msra.mxu0 0
    %156 = vmatprep.mubr.bf16.mxu0 0
    %157 = vmatmul.mubr.bf16.gmra.mrb[0].mxu0 %v113
    %v158 = vpop.f32.mrb[0].mxu0
    %v159 = vadd.f32 0.0, %v158
    %v160 = vpop.f32.mrb[0].mxu0
    %v161 = vadd.f32 0.0, %v160
    %v162 = vpop.f32.mrb[0].mxu0
    %v163 = vadd.f32 0.0, %v162
    %v164 = vpop.f32.mrb[0].mxu0
    %v165 = vadd.f32 0.0, %v164
    %166 = vmatprep.mubr.bf16.mxu0 0
    %167 = vmatmul.mubr.bf16.gmra.mrb[0].mxu0 %v116
    %v168 = vpop.f32.mrb[0].mxu0
    %v169 = vadd.f32 0.0, %v168
    %v170 = vpop.f32.mrb[0].mxu0
    %v171 = vadd.f32 0.0, %v170
    %v172 = vpop.f32.mrb[0].mxu0
    %v173 = vadd.f32 0.0, %v172
    %v174 = vpop.f32.mrb[0].mxu0
    %v175 = vadd.f32 0.0, %v174
    %176 = vmatprep.mubr.bf16.mxu0 0
    %177 = vmatmul.mubr.bf16.gmra.mrb[0].mxu0 %v119
    %v178 = vpop.f32.mrb[0].mxu0
    %v179 = vadd.f32 0.0, %v178
    %v180 = vpop.f32.mrb[0].mxu0
    %v181 = vadd.f32 0.0, %v180
    %v182 = vpop.f32.mrb[0].mxu0
    %v183 = vadd.f32 0.0, %v182
    %v184 = vpop.f32.mrb[0].mxu0
    %v185 = vadd.f32 0.0, %v184
    %186 = vmatprep.mubr.bf16.mxu0 0
    %187 = vmatmul.mubr.bf16.gmra.mrb[0].mxu0 %v122
    %v188 = vpop.f32.mrb[0].mxu0
    %v189 = vadd.f32 0.0, %v188
    %v190 = vpop.f32.mrb[0].mxu0
    %v191 = vadd.f32 0.0, %v190
    %v192 = vpop.f32.mrb[0].mxu0
    %v193 = vadd.f32 0.0, %v192
    %v194 = vpop.f32.mrb[0].mxu0
    %v195 = vadd.f32 0.0, %v194
    %196 = vdwg.mxu0
    %197 = vmatprep.subr.bf16.mxu0 %v98
    %198 = vmatpush1.bf16.msra.mxu0 %v97
    %199 = vmatprep.subr.bf16.mxu0 %v102
    %200 = vmatpush1.bf16.msra.mxu0 %v101
    %201 = vmatprep.subr.bf16.mxu0 0
    %202 = vmatpush1.bf16.msra.mxu0 0
    %203 = vmatprep.subr.bf16.mxu0 0
    %204 = vmatpush1.bf16.msra.mxu0 0
    %205 = vmatprep.subr.bf16.mxu0 0
    %206 = vmatpush1.bf16.msra.mxu0 0
    %207 = vmatprep.subr.bf16.mxu0 0
    %208 = vmatpush1.bf16.msra.mxu0 0
    %209 = vmatprep.subr.bf16.mxu0 0
    %210 = vmatpush1.bf16.msra.mxu0 0
    %211 = vmatprep.subr.bf16.mxu0 0
    %212 = vmatpush1.bf16.msra.mxu0 0
    %213 = vmatprep.subr.bf16.mxu0 0
    %214 = vmatpush1.bf16.msra.mxu0 0
    %215 = vmatprep.subr.bf16.mxu0 0
    %216 = vmatpush1.bf16.msra.mxu0 0
    %217 = vmatprep.subr.bf16.mxu0 0
    %218 = vmatpush1.bf16.msra.mxu0 0
    %219 = vmatprep.subr.bf16.mxu0 0
    %220 = vmatpush1.bf16.msra.mxu0 0
    %221 = vmatprep.subr.bf16.mxu0 0
    %222 = vmatpush1.bf16.msra.mxu0 0
    %223 = vmatprep.subr.bf16.mxu0 0
    %224 = vmatpush1.bf16.msra.mxu0 0
    %225 = vmatprep.subr.bf16.mxu0 0
    %226 = vmatpush1.bf16.msra.mxu0 0
    %227 = vmatprep.subr.bf16.mxu0 0
    %228 = vmatpush1.bf16.msra.mxu0 0
    %229 = vmatprep.mubr.bf16.mxu0 0
    %230 = vmatmul.mubr.bf16.gmra.mrb[0].mxu0 %v113
    %v231 = vpop.f32.mrb[0].mxu0
    %v232 = vadd.f32 0.0, %v231
    %v233 = vpop.f32.mrb[0].mxu0
    %v234 = vadd.f32 0.0, %v233
    %v235 = vpop.f32.mrb[0].mxu0
    %v236 = vadd.f32 0.0, %v235
    %v237 = vpop.f32.mrb[0].mxu0
    %v238 = vadd.f32 0.0, %v237
    %239 = vmatprep.mubr.bf16.mxu0 0
    %240 = vmatmul.mubr.bf16.gmra.mrb[0].mxu0 %v116
    %v241 = vpop.f32.mrb[0].mxu0
    %v242 = vadd.f32 0.0, %v241
    %v243 = vpop.f32.mrb[0].mxu0
    %v244 = vadd.f32 0.0, %v243
    %v245 = vpop.f32.mrb[0].mxu0
    %v246 = vadd.f32 0.0, %v245
    %v247 = vpop.f32.mrb[0].mxu0
    %v248 = vadd.f32 0.0, %v247
    %249 = vmatprep.mubr.bf16.mxu0 0
    %250 = vmatmul.mubr.bf16.gmra.mrb[0].mxu0 %v119
    %v251 = vpop.f32.mrb[0].mxu0
    %v252 = vadd.f32 0.0, %v251
    %v253 = vpop.f32.mrb[0].mxu0
    %v254 = vadd.f32 0.0, %v253
    %v255 = vpop.f32.mrb[0].mxu0
    %v256 = vadd.f32 0.0, %v255
    %v257 = vpop.f32.mrb[0].mxu0
    %v258 = vadd.f32 0.0, %v257
    %259 = vmatprep.mubr.bf16.mxu0 0
    %260 = vmatmul.mubr.bf16.gmra.mrb[0].mxu0 %v122
    %v261 = vpop.f32.mrb[0].mxu0
    %v262 = vadd.f32 0.0, %v261
    %v263 = vpop.f32.mrb[0].mxu0
    %v264 = vadd.f32 0.0, %v263
    %v265 = vpop.f32.mrb[0].mxu0
    %v266 = vadd.f32 0.0, %v265
    %v267 = vpop.f32.mrb[0].mxu0
    %v268 = vadd.f32 0.0, %v267
    %269 = vdwg.mxu0
    %v270 = vpack.c.bf16 %v163, %v159
    %v271 = vpack.c.bf16 %v165, %v161
    %v272 = vpack.c.bf16 %v236, %v232
    %v273 = vpack.c.bf16 %v238, %v234
    %v274 = vpack.c.bf16 %v173, %v169
    %v275 = vpack.c.bf16 %v175, %v171
    %v276 = vpack.c.bf16 %v246, %v242
    %v277 = vpack.c.bf16 %v248, %v244
    %v278 = vpack.c.bf16 %v183, %v179
    %v279 = vpack.c.bf16 %v185, %v181
    %v280 = vpack.c.bf16 %v256, %v252
    %v281 = vpack.c.bf16 %v258, %v254
    %v282 = vpack.c.bf16 %v193, %v189
    %v283 = vpack.c.bf16 %v195, %v191
    %v284 = vpack.c.bf16 %v266, %v262
    %v285 = vpack.c.bf16 %v268, %v264
    %v302 = vunpack.c.l.b16 %v270
    %v303 = vunpack.c.l.b16 %v271
    %v304 = vunpack.c.l.b16 %v272
    %v305 = vunpack.c.l.b16 %v273
    %v306 = vunpack.c.h.b16 %v270
    %v307 = vunpack.c.h.b16 %v271
    %v308 = vunpack.c.h.b16 %v272
    %v309 = vunpack.c.h.b16 %v273
    %v310 = vunpack.c.l.b16 %v274
    %v311 = vunpack.c.l.b16 %v275
    %v312 = vunpack.c.l.b16 %v276
    %v313 = vunpack.c.l.b16 %v277
    %v314 = vunpack.c.h.b16 %v274
    %v315 = vunpack.c.h.b16 %v275
    %v316 = vunpack.c.h.b16 %v276
    %v317 = vunpack.c.h.b16 %v277
    %v318 = vunpack.c.l.b16 %v278
    %v319 = vunpack.c.l.b16 %v279
    %v320 = vunpack.c.l.b16 %v280
    %v321 = vunpack.c.l.b16 %v281
    %v322 = vunpack.c.h.b16 %v278
    %v323 = vunpack.c.h.b16 %v279
    %v324 = vunpack.c.h.b16 %v280
    %v325 = vunpack.c.h.b16 %v281
    %v326 = vunpack.c.l.b16 %v282
    %v327 = vunpack.c.l.b16 %v283
    %v328 = vunpack.c.l.b16 %v284
    %v329 = vunpack.c.l.b16 %v285
    %v330 = vunpack.c.h.b16 %v282
    %v331 = vunpack.c.h.b16 %v283
    %v332 = vunpack.c.h.b16 %v284
    %v333 = vunpack.c.h.b16 %v285
    %v334 = vpack.c.b16 %v303, %v302
    %v335 = vpack.c.b16 %v305, %v304
    %v336 = vpack.c.b16 %v307, %v306
    %v337 = vpack.c.b16 %v309, %v308
    %v338 = vpack.c.b16 %v311, %v310
    %v339 = vpack.c.b16 %v313, %v312
    %v340 = vpack.c.b16 %v315, %v314
    %v341 = vpack.c.b16 %v317, %v316
    %v342 = vpack.c.b16 %v319, %v318
    %v343 = vpack.c.b16 %v321, %v320
    %v344 = vpack.c.b16 %v323, %v322
    %v345 = vpack.c.b16 %v325, %v324
    %v346 = vpack.c.b16 %v327, %v326
    %v347 = vpack.c.b16 %v329, %v328
    %v348 = vpack.c.b16 %v331, %v330
    %v349 = vpack.c.b16 %v333, %v332
    %366 = vst [vmem:[#allocation5] sm:$0xff] %v334
    %367 = vst [vmem:[#allocation5 + $0x8] sm:$0xff] %v335
    %368 = vst [vmem:[#allocation5 + $0x10] sm:$0xff] %v336
    %369 = vst [vmem:[#allocation5 + $0x18] sm:$0xff] %v337
    %370 = vst [vmem:[#allocation5 + $0x20] sm:$0xff] %v338
    %371 = vst [vmem:[#allocation5 + $0x28] sm:$0xff] %v339
    %372 = vst [vmem:[#allocation5 + $0x30] sm:$0xff] %v340
    %373 = vst [vmem:[#allocation5 + $0x38] sm:$0xff] %v341
    %374 = vst [vmem:[#allocation5 + $0x40] sm:$0xff] %v342
    %375 = vst [vmem:[#allocation5 + $0x48] sm:$0xff] %v343
    %376 = vst [vmem:[#allocation5 + $0x50] sm:$0xff] %v344
    %377 = vst [vmem:[#allocation5 + $0x58] sm:$0xff] %v345
    %378 = vst [vmem:[#allocation5 + $0x60] sm:$0xff] %v346
    %379 = vst [vmem:[#allocation5 + $0x68] sm:$0xff] %v347
    %380 = vst [vmem:[#allocation5 + $0x70] sm:$0xff] %v348
    %381 = vst [vmem:[#allocation5 + $0x78] sm:$0xff] %v349
    // Predicated region
    $region14: #{tpu_custom_call.1} parent=1 // pred_check
      _
    $region15: #{tpu_custom_call.1} parent=1 // pred_check_branch
      %383 = sbr.rel (0) target = $region17
    $region16: #{tpu_custom_call.1} parent=1 // pred_region
      %s385 = ssub.s32 2048, 2048
      %386 = vsyncadd [#allocation4], %s385
      %s387 = sshll.u32 [#allocation5], 4
      %s388 = int_to_ptr.vmem [resolvable:$true] %s387
      %393 = dma.vmem_to_hbm [thread:$0]  %s388, 2048, %s2, [#allocation4], 256, 256, 16
    $region17: #{tpu_custom_call.1} parent=1 // pred_fallthru
      _
    // Predicated region
    $region18: #{tpu_custom_call.1} parent=1 // pred_check
      _
    $region19: #{tpu_custom_call.1} parent=1 // pred_check_branch
      %395 = sbr.rel (0) target = $region21
    $region20: #{tpu_custom_call.1} parent=1 // pred_region
      %396 = dma.done [#allocation4], 2048
    $region21: #{tpu_custom_call.1} parent=1 // pred_fallthru
      _
    %397 = vsyncpa [#allocation3], 1
    %398 = vsyncpa [#allocation4], 1

</llo_original>
